<compile_context>
chip_gen: v7x
topology: tpu7x:2x2x1
jax: 0.10.0
libtpu: 0.0.40
codegen_flags: <defaults>
</compile_context>

<pallas_src>
import functools

import jax
import jax.numpy as jnp
from jax.experimental import pallas as pl
from jax.experimental.pallas import tpu as pltpu


LANE = 128      # vreg lane width (last dim)
SUBLANE = 8     # f32 sublane count (second-to-last dim)
MAX_TM = 512    # max batch-tile rows; double-buffered tiles stay well under
                # the 32 MiB VMEM limit below even on v7x


def _round_up(x, m):
    return (x + m - 1) // m * m


def fused_mlp_kernel(x_ref, w_ref, b_ref, o_ref):
    # One MXU pass per (TM, K) x-tile, f32 accumulation, bias add in f32 on
    # the VPU, single lane-dense store.
    acc = jnp.dot(x_ref[...], w_ref[...], preferred_element_type=jnp.float32)
    o_ref[...] = (acc + b_ref[...]).astype(o_ref.dtype)


@functools.partial(jax.jit, static_argnames=("image_size", "compute_dtype"))
def mlp_forward(x, params, *, image_size, compute_dtype=jnp.float32):
    """x: (B, image_size, image_size). Returns (B, num_classes) float32."""
    w1, b1, w2, b2, w3, b3, w4, b4 = params
    batch = x.shape[0]
    k = image_size * image_size
    num_classes = w4.shape[1]

    # --- Fuse the activation-free 4-layer stack into one affine map (f32). ---
    w_fused = (((w1 @ w2) @ w3) @ w4).astype(jnp.float32)                  # (K, C)
    bias_f = (((b1 @ w2 + b2) @ w3 + b3) @ w4 + b4).astype(jnp.float32)    # (1, C)

    # --- Pad to TPU-friendly shapes: lanes -> 128, batch sublanes -> 8. ---
    k_pad = _round_up(k, LANE)
    n_pad = _round_up(num_classes, LANE)
    b8 = _round_up(batch, SUBLANE)
    tm = min(MAX_TM, b8)
    b_rows = _round_up(b8, tm)

    x2d = jnp.reshape(x, (batch, k)).astype(jnp.float32)
    if (b_rows, k_pad) != (batch, k):
        x2d = jnp.pad(x2d, ((0, b_rows - batch), (0, k_pad - k)))
    if (k_pad, n_pad) != (k, num_classes):
        w_fused = jnp.pad(w_fused, ((0, k_pad - k), (0, n_pad - num_classes)))
        bias_f = jnp.pad(bias_f, ((0, 0), (0, n_pad - num_classes)))

    # MXU operands may be downcast (bf16 on v6e/v7x); bias stays f32.
    x_op = x2d.astype(compute_dtype)
    w_op = w_fused.astype(compute_dtype)

    grid = (b_rows // tm,)
    out = pl.pallas_call(
        fused_mlp_kernel,
        grid=grid,
        in_specs=[
            pl.BlockSpec((tm, k_pad), lambda i: (i, 0)),      # x tile: pipelined
            pl.BlockSpec((k_pad, n_pad), lambda i: (0, 0)),   # fused W: VMEM-resident
            pl.BlockSpec((1, n_pad), lambda i: (0, 0)),       # fused bias
        ],
        out_specs=pl.BlockSpec((tm, n_pad), lambda i: (i, 0)),
        out_shape=jax.ShapeDtypeStruct((b_rows, n_pad), jnp.float32),
        compiler_params=pltpu.CompilerParams(
            dimension_semantics=("parallel",),          # megacore split on v7x
            vmem_limit_bytes=32 * 1024 * 1024,          # fits v5e/v6e/v7x budgets
        ),
    )(x_op, w_op, bias_f)

    return out[:batch, :num_classes]


def init_params(key, image_size, hidden_size, num_classes):
    """Deterministic synthetic params. Weights stored as (in, out), biases as (1, out)."""
    dims = [
        (image_size * image_size, hidden_size),
        (hidden_size, hidden_size),
        (hidden_size, hidden_size),
        (hidden_size, num_classes),
    ]
    params = []
    for (fan_in, fan_out) in dims:
        key, kw, kb = jax.random.split(key, 3)
        bound = 1.0 / jnp.sqrt(fan_in)  # matches torch.nn.Linear default init range
        w = jax.random.uniform(kw, (fan_in, fan_out), jnp.float32, -bound, bound)
        b = jax.random.uniform(kb, (1, fan_out), jnp.float32, -bound, bound)
        params += [w, b]
    return tuple(params)


if __name__ == "__main__":
    batch_size = 2
    image_size = 16
    hidden_size = 32
    num_classes = 10

    key = jax.random.PRNGKey(0)
    key, kx = jax.random.split(key)
    x = jax.random.normal(kx, (batch_size, image_size, image_size), jnp.float32)
    params = init_params(key, image_size, hidden_size, num_classes)

    out = mlp_forward(x, params, image_size=image_size)
    out = jax.block_until_ready(out)
    assert out.shape == (batch_size, num_classes)

    w1, b1, w2, b2, w3, b3, w4, b4 = params
    x2d = x.reshape(batch_size, image_size * image_size)

    # Check 1 (tight): same fused affine map evaluated in plain JAX — verifies
    # the kernel's matmul/bias/padding/tiling plumbing.
    w_f = ((w1 @ w2) @ w3) @ w4
    b_f = ((b1 @ w2 + b2) @ w3 + b3) @ w4 + b4
    ref_fused = x2d @ w_f + b_f
    assert jnp.allclose(out, ref_fused, atol=1e-3, rtol=1e-3), \
        float(jnp.max(jnp.abs(out - ref_fused)))

    # Check 2 (module semantics): the original layer-by-layer forward.  Looser
    # tolerance because TPU's default matmul precision rounds operands to bf16
    # and the offline weight fusion reassociates those roundings (as noted in
    # the perf review); the math is otherwise identical.
    ref = x2d @ w1 + b1
    ref = ref @ w2 + b2
    ref = ref @ w3 + b3
    ref = ref @ w4 + b4
    assert jnp.allclose(out, ref, atol=1e-2, rtol=1e-2), \
        float(jnp.max(jnp.abs(out - ref)))

    print("KERNEL_OK")
</pallas_src>

<mosaic_0001>
module attributes {stable_mosaic.version = 11 : i64} {
  func.func @fused_mlp_kernel(%arg0: i32, %arg1: memref<8x256xf32, #tpu.memory_space<vmem>>, %arg2: memref<256x128xf32, #tpu.memory_space<vmem>>, %arg3: memref<1x128xf32, #tpu.memory_space<vmem>>, %arg4: memref<8x128xf32, #tpu.memory_space<vmem>>) attributes {dimension_semantics = [#tpu.dimension_semantics<parallel>], iteration_bounds = array<i64: 1>, scalar_prefetch = 0 : i64, scratch_operands = 0 : i64, tpu.core_type = #tpu.core_type<tc>, window_params = [{transform_indices = @transform_0, window_bounds = array<i64: 8, 256>}, {pipeline_mode = #tpu.pipeline_mode<synchronous>, transform_indices = @transform_1, window_bounds = array<i64: 256, 128>}, {pipeline_mode = #tpu.pipeline_mode<synchronous>, transform_indices = @transform_2, window_bounds = array<i64: 1, 128>}, {transform_indices = @transform_3, window_bounds = array<i64: 8, 128>}]} {
    %c0 = arith.constant 0 : index
    %c0_0 = arith.constant 0 : index
    %0 = vector.load %arg1[%c0, %c0_0] : memref<8x256xf32, #tpu.memory_space<vmem>>, vector<8x256xf32>
    %c0_1 = arith.constant 0 : index
    %c0_2 = arith.constant 0 : index
    %1 = vector.load %arg2[%c0_1, %c0_2] : memref<256x128xf32, #tpu.memory_space<vmem>>, vector<256x128xf32>
    %cst = arith.constant dense<0.000000e+00> : vector<8x128xf32>
    %2 = tpu.matmul %0, %1, %cst {dimension_numbers = #tpu.dot_dimension_numbers<[1], [0], [0], [1], [0, 0, 1, 1], [], []>} : vector<8x256xf32>, vector<256x128xf32>, vector<8x128xf32> -> vector<8x128xf32>
    %c0_3 = arith.constant 0 : index
    %c0_4 = arith.constant 0 : index
    %3 = vector.load %arg3[%c0_3, %c0_4] : memref<1x128xf32, #tpu.memory_space<vmem>>, vector<1x128xf32>
    %4 = vector.broadcast %3 : vector<1x128xf32> to vector<8x128xf32>
    %5 = arith.addf %2, %4 : vector<8x128xf32>
    %c0_5 = arith.constant 0 : index
    %c0_6 = arith.constant 0 : index
    %6 = vector.load %arg4[%c0_5, %c0_6] : memref<8x128xf32, #tpu.memory_space<vmem>>, vector<8x128xf32>
    tpu.vector_store %arg4[%c0_5, %c0_6], %5 {strides = array<i32>} : memref<8x128xf32, #tpu.memory_space<vmem>>, vector<8x128xf32>,
    return
  }
  func.func @transform_0(%arg0: i32) -> (i32, i32) {
    %c0_i32 = arith.constant 0 : i32
    %c0_i32_0 = arith.constant 0 : i32
    return %arg0, %c0_i32 : i32, i32
  }
  func.func @transform_1(%arg0: i32) -> (i32, i32) {
    %c0_i32 = arith.constant 0 : i32
    %c0_i32_0 = arith.constant 0 : i32
    %c0_i32_1 = arith.constant 0 : i32
    return %c0_i32, %c0_i32_0 : i32, i32
  }
  func.func @transform_2(%arg0: i32) -> (i32, i32) {
    %c0_i32 = arith.constant 0 : i32
    %c0_i32_0 = arith.constant 0 : i32
    %c0_i32_1 = arith.constant 0 : i32
    return %c0_i32, %c0_i32_0 : i32, i32
  }
  func.func @transform_3(%arg0: i32) -> (i32, i32) {
    %c0_i32 = arith.constant 0 : i32
    %c0_i32_0 = arith.constant 0 : i32
    return %arg0, %c0_i32 : i32, i32
  }
}

</mosaic_0001>

<llo_original>
// kernel: mlp_forward.1
$region0: #{mlp_forward.1}
  #allocation0 [shape = 'u32[]', space=smem, size = 0x4, offset = 0x4, fixed_abs, tag = 'smem constant byte address 0x4 - core index']
  #allocation1 [shape = 'u32[144,128]{1,0:T(1,128)}', space=vmem, size = 0x12000, scoped, tag = 'internal scratch']
  %s0 = inlined_call_operand.vmem [shape: f32[8,256], index: 0, kind: input, shape index: {}]
  %s1 = inlined_call_operand.vmem [shape: f32[256,128], index: 1, kind: input, shape index: {}]
  %s2 = inlined_call_operand.vmem [shape: f32[1,128], index: 2, kind: input, shape index: {}]
  %s3 = inlined_call_operand.vmem [shape: f32[8,128], index: 3, kind: output, shape index: {}]
  %s4 = sld [smem:[#allocation0]]
  $region22: #{mlp_forward.1} parent=0
    _
  %s6 = ssub.s32 1, %s4
  %s7 = scalar_select 0, %s6, %s4
  // Predicated region
  $region2: #{mlp_forward.1} parent=0 // pred_check
    _
  $region3: #{mlp_forward.1} parent=0 // pred_check_branch
    %9 = sbr.rel (0) target = $region5
  $region4: #{mlp_forward.1} parent=0 // pred_region
    _
  $region5: #{mlp_forward.1} parent=0 // pred_fallthru
    _
  // Predicated region
  $region6: #{mlp_forward.1} parent=0 // pred_check
    _
  $region7: #{mlp_forward.1} parent=0 // pred_check_branch
    %11 = sbr.rel (0) target = $region9
  $region8: #{mlp_forward.1} parent=0 // pred_region
    _
  $region9: #{mlp_forward.1} parent=0 // pred_fallthru
    _
  // Predicated region
  $region10: #{mlp_forward.1} parent=0 // pred_check
    _
  $region11: #{mlp_forward.1} parent=0 // pred_check_branch
    %13 = sbr.rel (0) target = $region13
  $region12: #{mlp_forward.1} parent=0 // pred_region
    _
  $region13: #{mlp_forward.1} parent=0 // pred_fallthru
    _
  %v14 = vld [vmem:[%s0] sm:$0xff]
  %v15 = vld [vmem:[%s0 + $0x8] sm:$0xff]
  %v16 = vld [vmem:[%s1] sm:$0xff]
  %v17 = vld [vmem:[%s1 + $0x8] sm:$0xff]
  %v18 = vld [vmem:[%s1 + $0x10] sm:$0xff]
  %v19 = vld [vmem:[%s1 + $0x18] sm:$0xff]
  %v20 = vld [vmem:[%s1 + $0x20] sm:$0xff]
  %v21 = vld [vmem:[%s1 + $0x28] sm:$0xff]
  %v22 = vld [vmem:[%s1 + $0x30] sm:$0xff]
  %v23 = vld [vmem:[%s1 + $0x38] sm:$0xff]
  %v24 = vld [vmem:[%s1 + $0x40] sm:$0xff]
  %v25 = vld [vmem:[%s1 + $0x48] sm:$0xff]
  %v26 = vld [vmem:[%s1 + $0x50] sm:$0xff]
  %v27 = vld [vmem:[%s1 + $0x58] sm:$0xff]
  %v28 = vld [vmem:[%s1 + $0x60] sm:$0xff]
  %v29 = vld [vmem:[%s1 + $0x68] sm:$0xff]
  %v30 = vld [vmem:[%s1 + $0x70] sm:$0xff]
  %v31 = vld [vmem:[%s1 + $0x78] sm:$0xff]
  %v32 = vld [vmem:[%s1 + $0x80] sm:$0xff]
  %v33 = vld [vmem:[%s1 + $0x88] sm:$0xff]
  %v34 = vld [vmem:[%s1 + $0x90] sm:$0xff]
  %v35 = vld [vmem:[%s1 + $0x98] sm:$0xff]
  %v36 = vld [vmem:[%s1 + $0xa0] sm:$0xff]
  %v37 = vld [vmem:[%s1 + $0xa8] sm:$0xff]
  %v38 = vld [vmem:[%s1 + $0xb0] sm:$0xff]
  %v39 = vld [vmem:[%s1 + $0xb8] sm:$0xff]
  %v40 = vld [vmem:[%s1 + $0xc0] sm:$0xff]
  %v41 = vld [vmem:[%s1 + $0xc8] sm:$0xff]
  %v42 = vld [vmem:[%s1 + $0xd0] sm:$0xff]
  %v43 = vld [vmem:[%s1 + $0xd8] sm:$0xff]
  %v44 = vld [vmem:[%s1 + $0xe0] sm:$0xff]
  %v45 = vld [vmem:[%s1 + $0xe8] sm:$0xff]
  %v46 = vld [vmem:[%s1 + $0xf0] sm:$0xff]
  %v47 = vld [vmem:[%s1 + $0xf8] sm:$0xff]
  %v48 = vld [vmem:[%s2] sm:$0x1]
  %v50 = vlaneseq
  %v51 = vshrl.u32 %v50, 7
  %v52 = vsub.s32 0, %v51
  %v53 = vrot.slane %v48, %v52
  %55 = vmatprep.subr.mxu0 0.0
  %56 = vmatpush1.msra.mxu0 %v16
  %57 = vmatprep.subr.mxu0 0.0
  %58 = vmatpush1.msra.mxu0 %v17
  %59 = vmatprep.subr.mxu0 0.0
  %60 = vmatpush1.msra.mxu0 %v18
  %61 = vmatprep.subr.mxu0 0.0
  %62 = vmatpush1.msra.mxu0 %v19
  %63 = vmatprep.subr.mxu0 0.0
  %64 = vmatpush1.msra.mxu0 %v20
  %65 = vmatprep.subr.mxu0 0.0
  %66 = vmatpush1.msra.mxu0 %v21
  %67 = vmatprep.subr.mxu0 0.0
  %68 = vmatpush1.msra.mxu0 %v22
  %69 = vmatprep.subr.mxu0 0.0
  %70 = vmatpush1.msra.mxu0 %v23
  %71 = vmatprep.subr.mxu0 0.0
  %72 = vmatpush1.msra.mxu0 %v24
  %73 = vmatprep.subr.mxu0 0.0
  %74 = vmatpush1.msra.mxu0 %v25
  %75 = vmatprep.subr.mxu0 0.0
  %76 = vmatpush1.msra.mxu0 %v26
  %77 = vmatprep.subr.mxu0 0.0
  %78 = vmatpush1.msra.mxu0 %v27
  %79 = vmatprep.subr.mxu0 0.0
  %80 = vmatpush1.msra.mxu0 %v28
  %81 = vmatprep.subr.mxu0 0.0
  %82 = vmatpush1.msra.mxu0 %v29
  %83 = vmatprep.subr.mxu0 0.0
  %84 = vmatpush1.msra.mxu0 %v30
  %85 = vmatprep.subr.mxu0 0.0
  %86 = vmatpush1.msra.mxu0 %v31
  %87 = vmatprep.subr.mxu0 0.0
  %88 = vmatpush1.msra.mxu0 %v32
  %89 = vmatprep.subr.mxu0 0.0
  %90 = vmatpush1.msra.mxu0 %v33
  %91 = vmatprep.subr.mxu0 0.0
  %92 = vmatpush1.msra.mxu0 %v34
  %93 = vmatprep.subr.mxu0 0.0
  %94 = vmatpush1.msra.mxu0 %v35
  %95 = vmatprep.subr.mxu0 0.0
  %96 = vmatpush1.msra.mxu0 %v36
  %97 = vmatprep.subr.mxu0 0.0
  %98 = vmatpush1.msra.mxu0 %v37
  %99 = vmatprep.subr.mxu0 0.0
  %100 = vmatpush1.msra.mxu0 %v38
  %101 = vmatprep.subr.mxu0 0.0
  %102 = vmatpush1.msra.mxu0 %v39
  %103 = vmatprep.subr.mxu0 0.0
  %104 = vmatpush1.msra.mxu0 %v40
  %105 = vmatprep.subr.mxu0 0.0
  %106 = vmatpush1.msra.mxu0 %v41
  %107 = vmatprep.subr.mxu0 0.0
  %108 = vmatpush1.msra.mxu0 %v42
  %109 = vmatprep.subr.mxu0 0.0
  %110 = vmatpush1.msra.mxu0 %v43
  %111 = vmatprep.subr.mxu0 0.0
  %112 = vmatpush1.msra.mxu0 %v44
  %113 = vmatprep.subr.mxu0 0.0
  %114 = vmatpush1.msra.mxu0 %v45
  %115 = vmatprep.subr.mxu0 0.0
  %116 = vmatpush1.msra.mxu0 %v46
  %117 = vmatprep.subr.mxu0 0.0
  %118 = vmatpush1.msra.mxu0 %v47
  %119 = vmatprep.mubr.f32.mxu0 %v15
  %120 = vmatmul.mubr.f32.gmra.mrb[0].mxu0 %v14
  %v121 = vpop.f32.mrb[0].mxu0
  %v122 = vadd.f32 %v53, %v121
  %v123 = vpop.f32.mrb[0].mxu0
  %124 = vdwg.mxu0
  %125 = vst [vmem:[%s3] sm:$0xff] %v122
  // Predicated region
  $region14: #{mlp_forward.1} parent=0 // pred_check
    _
  $region15: #{mlp_forward.1} parent=0 // pred_check_branch
    %127 = sbr.rel (0) target = $region17
  $region16: #{mlp_forward.1} parent=0 // pred_region
    _
  $region17: #{mlp_forward.1} parent=0 // pred_fallthru
    _
  // Predicated region
  $region18: #{mlp_forward.1} parent=0 // pred_check
    _
  $region19: #{mlp_forward.1} parent=0 // pred_check_branch
    %129 = sbr.rel (0) target = $region21
  $region20: #{mlp_forward.1} parent=0 // pred_region
    _
  $region21: #{mlp_forward.1} parent=0 // pred_fallthru
    _

</llo_original>
